<compile_context>
chip_gen: v6e
topology: v6e:2x2x1
jax: 0.10.0
libtpu: 0.0.40
codegen_flags: <defaults>
</compile_context>

<pallas_src>
import functools

import jax
import jax.numpy as jnp
import numpy as np
from jax.experimental import pallas as pl
from jax.experimental.pallas import tpu as pltpu


# ----------------------------------------------------------------------------
# Mask construction (buffer `kernel_filter` of the PyTorch module).
# TODO(synk): the original kernel_filter() source is not part of the snippet;
# this reproduces the standard gated-PixelCNN vertical / horizontal stack mask
# (horizontal stack: center row only, strictly-left for the first layer;
#  vertical stack: rows above center, center row included unless `blinded`).
# ----------------------------------------------------------------------------
def kernel_filter(kh, kw, out_c, in_c, horizontal, first_layer, blinded):
    m = np.zeros((kh, kw), dtype=np.float32)
    ch, cw = kh // 2, kw // 2
    if horizontal:
        c_end = cw if first_layer else cw + 1
        m[ch, :c_end] = 1.0
    else:
        r_end = ch if blinded else ch + 1
        m[:r_end, :] = 1.0
    return np.broadcast_to(m, (out_c, in_c, kh, kw)).copy()


# ----------------------------------------------------------------------------
# Pallas kernel: one lane-dense MXU matmul per pixel tile.
#   p_ref: (K_pad, TILE)   bf16   im2col patches (K = KH*KW*Cin, pixels on lanes)
#   w_ref: (Cout, K_pad)   bf16   masked, reshaped weights (resident)
#   b_ref: (Cout, 1)       f32    bias (resident)
#   o_ref: (Cout, TILE)    f32    output tile (pixels on lanes -> unmasked vst)
# ----------------------------------------------------------------------------
def masked_conv_matmul_kernel(p_ref, w_ref, b_ref, o_ref):
    acc = jnp.dot(w_ref[...], p_ref[...], preferred_element_type=jnp.float32)
    o_ref[...] = (acc + b_ref[...]).astype(o_ref.dtype)


@functools.partial(jax.jit, static_argnames=("stride", "padding", "tile_cols"))
def masked_cnn_forward(x_nchw, W_oikk, b, mask, *, stride=1, padding="same",
                       tile_cols=1024):
    """Forward of MaskedCNN: W *= mask ; conv2d(x, W, b, stride, padding)."""
    assert stride == 1 and padding == "same", "module defaults: stride=1, 'same'"
    Wm = W_oikk * mask                                     # (Cout, Cin, KH, KW)
    Cout, Cin, KH, KW = Wm.shape
    N, Cx, H, Wd = x_nchw.shape
    assert Cx == Cin

    # PyTorch 'same' padding rule (stride=1): left = total // 2, extra on right.
    ph_t, pw_t = KH - 1, KW - 1
    ph_l, pw_l = ph_t // 2, pw_t // 2
    xp = jnp.pad(x_nchw,
                 ((0, 0), (0, 0), (ph_l, ph_t - ph_l), (pw_l, pw_t - pw_l)))

    # Transposed im2col directly from NCHW (no NCHW->NHWC boundary transpose):
    # rows = (tap, cin), cols = flattened (n, h, w) pixels (lane-dense).
    taps = [xp[:, :, i:i + H, j:j + Wd]                    # each (N, Cin, H, W)
            for i in range(KH) for j in range(KW)]
    patches = jnp.stack(taps, axis=0)                      # (T, N, Cin, H, W)
    patches = jnp.transpose(patches, (0, 2, 1, 3, 4))      # (T, Cin, N, H, W)
    K = KH * KW * Cin
    R = N * H * Wd
    patches = patches.reshape(K, R).astype(jnp.bfloat16)   # (K, R), pixels minor

    # Weight matrix (Cout, K) with K index = (i*KW + j)*Cin + c (matches rows).
    w_mat = jnp.transpose(Wm, (0, 2, 3, 1)).reshape(Cout, K).astype(jnp.bfloat16)
    b2 = b.reshape(Cout, 1).astype(jnp.float32)

    # Pad the contraction dim to a multiple of 16 (bf16 sublane packing).
    K_pad = ((K + 15) // 16) * 16
    if K_pad != K:
        patches = jnp.pad(patches, ((0, K_pad - K), (0, 0)))
        w_mat = jnp.pad(w_mat, ((0, 0), (0, K_pad - K)))

    # Pixel-axis tiling: tile is a multiple of 128 lanes, as large as is useful.
    tile = max(128, (int(tile_cols) // 128) * 128)
    tile = min(tile, pl.cdiv(R, 128) * 128)
    R_pad = pl.cdiv(R, tile) * tile
    if R_pad != R:
        patches = jnp.pad(patches, ((0, 0), (0, R_pad - R)))

    grid = (R_pad // tile,)
    out_t = pl.pallas_call(
        masked_conv_matmul_kernel,
        out_shape=jax.ShapeDtypeStruct((Cout, R_pad), jnp.float32),
        grid=grid,
        in_specs=[
            pl.BlockSpec((K_pad, tile), lambda i: (0, i)),   # patches tile
            pl.BlockSpec((Cout, K_pad), lambda i: (0, 0)),   # weights (resident)
            pl.BlockSpec((Cout, 1), lambda i: (0, 0)),       # bias (resident)
        ],
        out_specs=pl.BlockSpec((Cout, tile), lambda i: (0, i)),
        compiler_params=pltpu.CompilerParams(
            dimension_semantics=("parallel",),               # shard tiles on v7x
            vmem_limit_bytes=32 * 1024 * 1024),              # safe on v5e/v6e/v7x
    )(patches, w_mat, b2)

    out = out_t[:, :R].reshape(Cout, N, H, Wd)               # (Cout, N, H, W)
    return jnp.transpose(out, (1, 0, 2, 3)).astype(x_nchw.dtype)  # NCHW


if __name__ == "__main__":
    # Module config (small, consistent with MaskedCNN defaults)
    in_channels, out_channels = 4, 8
    kernel_height = kernel_width = 3
    horizontal, first_layer, blinded = False, False, False

    key = jax.random.PRNGKey(0)
    kx, kw_ = jax.random.split(key)

    # parameters: W ~ 0.1 * randn, b = 0  (deterministic, in-script)
    W = 0.1 * jax.random.normal(
        kw_, (out_channels, in_channels, kernel_height, kernel_width),
        dtype=jnp.float32)
    b = jnp.zeros((out_channels,), dtype=jnp.float32)
    mask = jnp.asarray(kernel_filter(kernel_height, kernel_width,
                                     out_channels, in_channels,
                                     horizontal, first_layer, blinded))

    # input: NCHW, batch=2, channels=4, spatial=16
    x = jax.random.normal(kx, (2, in_channels, 16, 16), dtype=jnp.float32)

    y = jax.block_until_ready(masked_cnn_forward(x, W, b, mask))

    # Reference: XLA conv on the SAME bf16-quantized inputs (f32 accumulation),
    # so the comparison is apples-to-apples with the bf16 kernel path.
    Wm = W * mask
    xq = x.astype(jnp.bfloat16).astype(jnp.float32)
    wq = Wm.astype(jnp.bfloat16).astype(jnp.float32)
    y_ref = jax.lax.conv_general_dilated(
        xq, wq, window_strides=(1, 1),
        padding=((1, 1), (1, 1)),
        dimension_numbers=("NCHW", "OIHW", "NCHW")) + b.reshape(1, -1, 1, 1)

    assert y.shape == (2, out_channels, 16, 16)
    np.testing.assert_allclose(np.asarray(y), np.asarray(y_ref),
                               rtol=1e-4, atol=1e-4)
    print("KERNEL_OK")
</pallas_src>

<mosaic_0001>
module attributes {stable_mosaic.version = 11 : i64} {
  func.func @masked_conv_matmul_kernel(%arg0: i32, %arg1: memref<48x512xbf16, #tpu.memory_space<vmem>>, %arg2: memref<8x48xbf16, #tpu.memory_space<vmem>>, %arg3: memref<8x1xf32, #tpu.memory_space<vmem>>, %arg4: memref<8x512xf32, #tpu.memory_space<vmem>>) attributes {dimension_semantics = [#tpu.dimension_semantics<parallel>], iteration_bounds = array<i64: 1>, scalar_prefetch = 0 : i64, scratch_operands = 0 : i64, tpu.core_type = #tpu.core_type<tc>, window_params = [{transform_indices = @transform_0, window_bounds = array<i64: 48, 512>}, {pipeline_mode = #tpu.pipeline_mode<synchronous>, transform_indices = @transform_1, window_bounds = array<i64: 8, 48>}, {pipeline_mode = #tpu.pipeline_mode<synchronous>, transform_indices = @transform_2, window_bounds = array<i64: 8, 1>}, {transform_indices = @transform_3, window_bounds = array<i64: 8, 512>}]} {
    %c0 = arith.constant 0 : index
    %c0_0 = arith.constant 0 : index
    %0 = vector.load %arg2[%c0, %c0_0] : memref<8x48xbf16, #tpu.memory_space<vmem>>, vector<8x48xbf16>
    %c0_1 = arith.constant 0 : index
    %c0_2 = arith.constant 0 : index
    %1 = vector.load %arg1[%c0_1, %c0_2] : memref<48x512xbf16, #tpu.memory_space<vmem>>, vector<48x512xbf16>
    %cst = arith.constant dense<0.000000e+00> : vector<8x512xf32>
    %2 = tpu.matmul %0, %1, %cst {dimension_numbers = #tpu.dot_dimension_numbers<[1], [0], [0], [1], [0, 0, 1, 1], [], []>} : vector<8x48xbf16>, vector<48x512xbf16>, vector<8x512xf32> -> vector<8x512xf32>
    %c0_3 = arith.constant 0 : index
    %c0_4 = arith.constant 0 : index
    %3 = vector.load %arg3[%c0_3, %c0_4] : memref<8x1xf32, #tpu.memory_space<vmem>>, vector<8x1xf32>
    %4 = vector.broadcast %3 : vector<8x1xf32> to vector<8x512xf32>
    %5 = arith.addf %2, %4 : vector<8x512xf32>
    %c0_5 = arith.constant 0 : index
    %c0_6 = arith.constant 0 : index
    %6 = vector.load %arg4[%c0_5, %c0_6] : memref<8x512xf32, #tpu.memory_space<vmem>>, vector<8x512xf32>
    tpu.vector_store %arg4[%c0_5, %c0_6], %5 {strides = array<i32>} : memref<8x512xf32, #tpu.memory_space<vmem>>, vector<8x512xf32>,
    return
  }
  func.func @transform_0(%arg0: i32) -> (i32, i32) {
    %c0_i32 = arith.constant 0 : i32
    %c0_i32_0 = arith.constant 0 : i32
    return %c0_i32, %arg0 : i32, i32
  }
  func.func @transform_1(%arg0: i32) -> (i32, i32) {
    %c0_i32 = arith.constant 0 : i32
    %c0_i32_0 = arith.constant 0 : i32
    %c0_i32_1 = arith.constant 0 : i32
    return %c0_i32, %c0_i32_0 : i32, i32
  }
  func.func @transform_2(%arg0: i32) -> (i32, i32) {
    %c0_i32 = arith.constant 0 : i32
    %c0_i32_0 = arith.constant 0 : i32
    %c0_i32_1 = arith.constant 0 : i32
    return %c0_i32, %c0_i32_0 : i32, i32
  }
  func.func @transform_3(%arg0: i32) -> (i32, i32) {
    %c0_i32 = arith.constant 0 : i32
    %c0_i32_0 = arith.constant 0 : i32
    return %c0_i32, %arg0 : i32, i32
  }
}

</mosaic_0001>

<llo_original>
// kernel: masked_cnn_forward.1
$region0: #{masked_cnn_forward.1}
  #allocation0 [shape = 'u32[]', space=smem, size = 0x4, offset = 0x4, fixed_abs, tag = 'smem constant byte address 0x4 - core index']
  #allocation1 [shape = 'u32[144,128]{1,0:T(1,128)}', space=vmem, size = 0x12000, scoped, tag = 'internal scratch']
  %s0 = inlined_call_operand.vmem [shape: bf16[48,512], index: 0, kind: input, shape index: {}]
  %s1 = inlined_call_operand.vmem [shape: bf16[8,48], index: 1, kind: input, shape index: {}]
  %s2 = inlined_call_operand.vmem [shape: f32[8,1], index: 2, kind: input, shape index: {}]
  %s3 = inlined_call_operand.vmem [shape: f32[8,512], index: 3, kind: output, shape index: {}]
  %s4 = sld [smem:[#allocation0]]
  $region22: #{masked_cnn_forward.1} parent=0
    _
  %s6 = ssub.s32 1, %s4
  %s7 = scalar_select 0, %s6, %s4
  // Predicated region
  $region2: #{masked_cnn_forward.1} parent=0 // pred_check
    _
  $region3: #{masked_cnn_forward.1} parent=0 // pred_check_branch
    %9 = sbr.rel (0) target = $region5
  $region4: #{masked_cnn_forward.1} parent=0 // pred_region
    _
  $region5: #{masked_cnn_forward.1} parent=0 // pred_fallthru
    _
  // Predicated region
  $region6: #{masked_cnn_forward.1} parent=0 // pred_check
    _
  $region7: #{masked_cnn_forward.1} parent=0 // pred_check_branch
    %11 = sbr.rel (0) target = $region9
  $region8: #{masked_cnn_forward.1} parent=0 // pred_region
    _
  $region9: #{masked_cnn_forward.1} parent=0 // pred_fallthru
    _
  // Predicated region
  $region10: #{masked_cnn_forward.1} parent=0 // pred_check
    _
  $region11: #{masked_cnn_forward.1} parent=0 // pred_check_branch
    %13 = sbr.rel (0) target = $region13
  $region12: #{masked_cnn_forward.1} parent=0 // pred_region
    _
  $region13: #{masked_cnn_forward.1} parent=0 // pred_fallthru
    _
  %v15 = vld [vmem:[%s1] sm:$0xf]
  %v16 = vld [vmem:[%s0] sm:$0xff]
  %v17 = vld [vmem:[%s0 + $0x8] sm:$0xff]
  %v18 = vld [vmem:[%s0 + $0x10] sm:$0xff]
  %v19 = vld [vmem:[%s0 + $0x18] sm:$0xff]
  %v20 = vld [vmem:[%s0 + $0x20] sm:$0xff]
  %v21 = vld [vmem:[%s0 + $0x28] sm:$0xff]
  %v22 = vld [vmem:[%s0 + $0x30] sm:$0xff]
  %v23 = vld [vmem:[%s0 + $0x38] sm:$0xff]
  %v24 = vld [vmem:[%s0 + $0x40] sm:$0xff]
  %v25 = vld [vmem:[%s0 + $0x48] sm:$0xff]
  %v26 = vld [vmem:[%s0 + $0x50] sm:$0xff]
  %v27 = vld [vmem:[%s0 + $0x58] sm:$0xff]
  %v28 = vld [vmem:[%s2] sm:$0xff]
  %30 = vset.pattern.permute.xlu0 0
  %31 = vperm.xlu0 %30, %v28
  %v32 = vpop.permute.xlu0 %31
  %v46 = vunpack.c.l.b16 %v16
  %v47 = vunpack.c.h.b16 %v16
  %v48 = vunpack.c.l.b16 %v17
  %v49 = vunpack.c.h.b16 %v17
  %v50 = vunpack.c.l.b16 %v18
  %v51 = vunpack.c.h.b16 %v18
  %v52 = vunpack.c.l.b16 %v19
  %v53 = vunpack.c.h.b16 %v19
  %v54 = vunpack.c.l.b16 %v20
  %v55 = vunpack.c.h.b16 %v20
  %v56 = vunpack.c.l.b16 %v21
  %v57 = vunpack.c.h.b16 %v21
  %v58 = vunpack.c.l.b16 %v22
  %v59 = vunpack.c.h.b16 %v22
  %v60 = vunpack.c.l.b16 %v23
  %v61 = vunpack.c.h.b16 %v23
  %v62 = vunpack.c.l.b16 %v24
  %v63 = vunpack.c.h.b16 %v24
  %v64 = vunpack.c.l.b16 %v25
  %v65 = vunpack.c.h.b16 %v25
  %v66 = vunpack.c.l.b16 %v26
  %v67 = vunpack.c.h.b16 %v26
  %v68 = vunpack.c.l.b16 %v27
  %v69 = vunpack.c.h.b16 %v27
  %v70 = vpack.c.b16 %v50, %v46
  %v71 = vpack.c.b16 %v51, %v47
  %v72 = vpack.c.b16 %v52, %v48
  %v73 = vpack.c.b16 %v53, %v49
  %v74 = vpack.c.b16 %v58, %v54
  %v75 = vpack.c.b16 %v59, %v55
  %v76 = vpack.c.b16 %v60, %v56
  %v77 = vpack.c.b16 %v61, %v57
  %v78 = vpack.c.b16 %v66, %v62
  %v79 = vpack.c.b16 %v67, %v63
  %v80 = vpack.c.b16 %v68, %v64
  %v81 = vpack.c.b16 %v69, %v65
  %vm94 = vcmask 392192
  %v96 = vsel %vm94, %v15, 0
  %98 = vmatprep.subr.bf16.mxu0 0
  %99 = vmatpush1.bf16.msra.mxu0 0
  %100 = vmatprep.subr.bf16.mxu0 0
  %101 = vmatpush1.bf16.msra.mxu0 0
  %102 = vmatprep.subr.bf16.mxu0 0
  %103 = vmatpush1.bf16.msra.mxu0 0
  %104 = vmatprep.subr.bf16.mxu0 0
  %105 = vmatpush1.bf16.msra.mxu0 0
  %106 = vmatprep.subr.bf16.mxu0 0
  %107 = vmatpush1.bf16.msra.mxu0 0
  %108 = vmatprep.subr.bf16.mxu0 %v79
  %109 = vmatpush1.bf16.msra.mxu0 %v78
  %110 = vmatprep.subr.bf16.mxu0 %v75
  %111 = vmatpush1.bf16.msra.mxu0 %v74
  %112 = vmatprep.subr.bf16.mxu0 %v71
  %113 = vmatpush1.bf16.msra.mxu0 %v70
  %114 = vmatprep.subr.bf16.mxu0 0
  %115 = vmatpush2.bf16.msra.mxu0 0
  %116 = vmatprep.subr.bf16.mxu0 0
  %117 = vmatpush2.bf16.msra.mxu0 0
  %118 = vmatprep.subr.bf16.mxu0 0
  %119 = vmatpush2.bf16.msra.mxu0 0
  %120 = vmatprep.subr.bf16.mxu0 0
  %121 = vmatpush2.bf16.msra.mxu0 0
  %122 = vmatprep.subr.bf16.mxu0 0
  %123 = vmatpush2.bf16.msra.mxu0 0
  %124 = vmatprep.subr.bf16.mxu0 0
  %125 = vmatpush2.bf16.msra.mxu0 0
  %126 = vmatprep.subr.bf16.mxu0 0
  %127 = vmatpush2.bf16.msra.mxu0 0
  %128 = vmatprep.subr.bf16.mxu0 0
  %129 = vmatpush2.bf16.msra.mxu0 0
  %130 = vmatprep.mubr.bf16.mxu0 0
  %131 = vmatmul.mubr.bf16.gmra.mxu0 %v96
  %v132 = vpop.f32.mrf.mxu0
  %v133 = vadd.f32 %v32, %v132
  %v134 = vpop.f32.mrf.mxu0
  %v135 = vadd.f32 %v32, %v134
  %v136 = vpop.f32.mrf.mxu0
  %v137 = vpop.f32.mrf.mxu0
  %138 = vdwg.mxu0
  %139 = vmatprep.subr.bf16.mxu0 0
  %140 = vmatpush1.bf16.msra.mxu0 0
  %141 = vmatprep.subr.bf16.mxu0 0
  %142 = vmatpush1.bf16.msra.mxu0 0
  %143 = vmatprep.subr.bf16.mxu0 0
  %144 = vmatpush1.bf16.msra.mxu0 0
  %145 = vmatprep.subr.bf16.mxu0 0
  %146 = vmatpush1.bf16.msra.mxu0 0
  %147 = vmatprep.subr.bf16.mxu0 0
  %148 = vmatpush1.bf16.msra.mxu0 0
  %149 = vmatprep.subr.bf16.mxu0 %v81
  %150 = vmatpush1.bf16.msra.mxu0 %v80
  %151 = vmatprep.subr.bf16.mxu0 %v77
  %152 = vmatpush1.bf16.msra.mxu0 %v76
  %153 = vmatprep.subr.bf16.mxu0 %v73
  %154 = vmatpush1.bf16.msra.mxu0 %v72
  %155 = vmatprep.subr.bf16.mxu0 0
  %156 = vmatpush2.bf16.msra.mxu0 0
  %157 = vmatprep.subr.bf16.mxu0 0
  %158 = vmatpush2.bf16.msra.mxu0 0
  %159 = vmatprep.subr.bf16.mxu0 0
  %160 = vmatpush2.bf16.msra.mxu0 0
  %161 = vmatprep.subr.bf16.mxu0 0
  %162 = vmatpush2.bf16.msra.mxu0 0
  %163 = vmatprep.subr.bf16.mxu0 0
  %164 = vmatpush2.bf16.msra.mxu0 0
  %165 = vmatprep.subr.bf16.mxu0 0
  %166 = vmatpush2.bf16.msra.mxu0 0
  %167 = vmatprep.subr.bf16.mxu0 0
  %168 = vmatpush2.bf16.msra.mxu0 0
  %169 = vmatprep.subr.bf16.mxu0 0
  %170 = vmatpush2.bf16.msra.mxu0 0
  %171 = vmatprep.mubr.bf16.mxu0 0
  %172 = vmatmul.mubr.bf16.gmra.mxu0 %v96
  %v173 = vpop.f32.mrf.mxu0
  %v174 = vadd.f32 %v32, %v173
  %v175 = vpop.f32.mrf.mxu0
  %v176 = vadd.f32 %v32, %v175
  %v177 = vpop.f32.mrf.mxu0
  %v178 = vpop.f32.mrf.mxu0
  %179 = vdwg.mxu0
  %180 = vst [vmem:[%s3] sm:$0xff] %v133
  %181 = vst [vmem:[%s3 + $0x8] sm:$0xff] %v135
  %182 = vst [vmem:[%s3 + $0x10] sm:$0xff] %v174
  %183 = vst [vmem:[%s3 + $0x18] sm:$0xff] %v176
  // Predicated region
  $region14: #{masked_cnn_forward.1} parent=0 // pred_check
    _
  $region15: #{masked_cnn_forward.1} parent=0 // pred_check_branch
    %185 = sbr.rel (0) target = $region17
  $region16: #{masked_cnn_forward.1} parent=0 // pred_region
    _
  $region17: #{masked_cnn_forward.1} parent=0 // pred_fallthru
    _
  // Predicated region
  $region18: #{masked_cnn_forward.1} parent=0 // pred_check
    _
  $region19: #{masked_cnn_forward.1} parent=0 // pred_check_branch
    %187 = sbr.rel (0) target = $region21
  $region20: #{masked_cnn_forward.1} parent=0 // pred_region
    _
  $region21: #{masked_cnn_forward.1} parent=0 // pred_fallthru
    _

</llo_original>
